<compile_context>
chip_gen: v7x
topology: tpu7x:2x2x1
jax: 0.10.0
libtpu: 0.0.40
codegen_flags: <defaults>
</compile_context>

<pallas_src>
import functools

import jax
import jax.numpy as jnp
from jax.experimental import pallas as pl
from jax.experimental.pallas import tpu as pltpu


def _round_up(x, m):
    return ((x + m - 1) // m) * m


def _embed_kernel(patches_ref, w_ref, pos_ref, out_ref):
    # patches_ref: (1, Mtot, Kp) bf16 -- im2col for one image; row 0 all-zero
    #              (class-token slot), rows >= num_positions and cols >= K are
    #              zero padding (contribute 0 to the dot).
    # w_ref:       (Kp, TN) bf16     -- patch-embedding weight tile.
    # pos_ref:     (num_positions, TN) f32 -- row 0 = class_emb + pos_emb[0],
    #              rows 1.. = pos_emb[1:].
    # out_ref:     (1, num_positions, TN)
    num_positions = pos_ref.shape[0]
    pe = jnp.dot(patches_ref[0], w_ref[...],
                 preferred_element_type=jnp.float32)        # (Mtot, TN) f32
    # Row 0 of pe is exactly zero, so one aligned store covers class token and
    # all patch rows (no sublane-offset masked stores).
    out_ref[0] = (pe[:num_positions] + pos_ref[...]).astype(out_ref.dtype)


def _num_tensorcores_per_chip():
    # v7x has 2 TensorCores per chip; v5e/v6e have 1.  Detection is advisory:
    # falling back to 1 is always correct, just less parallel on v7x.
    try:
        kind = (getattr(jax.devices()[0], "device_kind", "") or "").lower()
        if "v7" in kind or "tpu7" in kind:
            return 2
    except Exception:
        pass
    return 1


def _choose_tn(embed_dim, num_cores):
    # Single-core chips: one embed tile (no redundant weight/pos re-streaming).
    # Dual-core v7x: split embed_dim in two 128-multiple halves, one per core.
    if num_cores >= 2 and embed_dim % 256 == 0:
        return embed_dim // 2
    return embed_dim


def clip_vision_embeddings(image, patch_weight, class_embedding,
                           position_embedding, patch_size):
    """image: (B, C, H, W) float32 (NCHW, like PyTorch).
    patch_weight: (embed_dim, C, P, P)  (torch Conv2d weight layout).
    class_embedding: (embed_dim,)
    position_embedding: (num_positions, embed_dim)
    """
    B, C, H, W = image.shape
    D = patch_weight.shape[0]
    P = patch_size
    hp, wp = H // P, W // P
    num_patches = hp * wp
    num_positions = num_patches + 1
    K = C * P * P
    out_dtype = image.dtype

    # --- glue: im2col in bf16 (reshape/transpose only, no compute) ---
    # (B, C, hp, P, wp, P) -> (B, hp, wp, C, P, P) -> (B, num_patches, C*P*P)
    # Patch flattening order (c, kh, kw) matches torch Conv2d.
    img_bf16 = image.astype(jnp.bfloat16)
    patches = img_bf16.reshape(B, C, hp, P, wp, P)
    patches = jnp.transpose(patches, (0, 2, 4, 1, 3, 5)).reshape(B, num_patches, K)

    # One pad pass: prepend the zero class row, pad rows to a multiple of 8
    # and K to a multiple of 128 (zero padding contributes 0 to the matmul).
    Kp = _round_up(K, 128)
    Mtot = _round_up(num_positions, 8)
    patches = jnp.pad(patches, ((0, 0),
                                (1, Mtot - num_positions),
                                (0, Kp - K)))

    # Conv2d weight (out, in, kh, kw) -> matmul weight (Kp, D), bf16.
    w_mat = patch_weight.reshape(D, K).T.astype(jnp.bfloat16)
    if Kp != K:
        w_mat = jnp.pad(w_mat, ((0, Kp - K), (0, 0)))

    # Position table with the class token folded into row 0 (tiny).
    pos_tab = jnp.concatenate(
        [(class_embedding + position_embedding[0]).reshape(1, D),
         position_embedding[1:]], axis=0).astype(jnp.float32)  # (num_positions, D)

    # Per-generation embed_dim tiling.
    TN = _choose_tn(D, _num_tensorcores_per_chip())
    nd = D // TN

    # VMEM budget: actual double-buffered blocks + matmul intermediate + headroom.
    out_item = jnp.dtype(out_dtype).itemsize
    block_bytes = (Mtot * Kp * 2                 # patches block (bf16)
                   + Kp * TN * 2                 # weight tile   (bf16)
                   + num_positions * TN * 4      # pos table     (f32)
                   + num_positions * TN * out_item)
    acc_bytes = Mtot * TN * 4                    # f32 matmul result
    need = 2 * block_bytes + acc_bytes
    vmem_cap = 40 * 1024 * 1024                  # comfortably below v7x 64 MiB
    vmem_limit = int(min(max(need + (2 << 20), 4 << 20), vmem_cap))
    assert need + (1 << 20) <= vmem_limit, (
        "CLIP embedding working set exceeds VMEM cap; pick a smaller TN")

    out = pl.pallas_call(
        _embed_kernel,
        out_shape=jax.ShapeDtypeStruct((B, num_positions, D), out_dtype),
        grid_spec=pltpu.PrefetchScalarGridSpec(
            num_scalar_prefetch=0,
            # Batch innermost: weight / pos table blocks (index_maps depend
            # only on n) stay VMEM-resident across the batch axis.
            grid=(nd, B),
            in_specs=[
                pl.BlockSpec((1, Mtot, Kp), lambda n, b: (b, 0, 0)),
                pl.BlockSpec((Kp, TN), lambda n, b: (0, n)),
                pl.BlockSpec((num_positions, TN), lambda n, b: (0, n)),
            ],
            out_specs=pl.BlockSpec((1, num_positions, TN),
                                   lambda n, b: (b, 0, n)),
        ),
        compiler_params=pltpu.CompilerParams(
            dimension_semantics=("parallel", "parallel"),
            vmem_limit_bytes=vmem_limit),
    )(patches, w_mat, pos_tab)
    return out


def _reference(image, patch_weight, class_embedding, position_embedding, patch_size):
    # Full-precision reference matching the PyTorch module.
    B, C, H, W = image.shape
    embed_dim = patch_weight.shape[0]
    P = patch_size
    hp, wp = H // P, W // P
    patches = image.reshape(B, C, hp, P, wp, P)
    patches = jnp.transpose(patches, (0, 2, 4, 1, 3, 5)).reshape(B, hp * wp, C * P * P)
    w_mat = patch_weight.reshape(embed_dim, C * P * P).T
    pe = jnp.einsum("bnk,kd->bnd", patches, w_mat)
    cls = jnp.broadcast_to(class_embedding.reshape(1, 1, embed_dim), (B, 1, embed_dim))
    emb = jnp.concatenate([cls, pe], axis=1)
    return emb + position_embedding[None, :, :]


if __name__ == "__main__":
    # Small config consistent with the module:
    #   num_channels=4, image_size=16, patch_size=4, hidden_size=32
    # (Production CLIP shapes, e.g. C=3, H=W=336, P=14, D=1280, exercise the
    #  K-padding and embed_dim tiling paths; this toy size only checks correctness.)
    B, C, H, W = 2, 4, 16, 16
    P = 4
    D = 32
    num_positions = (H // P) * (W // P) + 1

    key = jax.random.PRNGKey(0)
    k_img, k_w, k_cls, k_pos = jax.random.split(key, 4)
    image = jax.random.normal(k_img, (B, C, H, W), dtype=jnp.float32)
    patch_weight = jax.random.normal(k_w, (D, C, P, P), dtype=jnp.float32) * 0.02
    class_embedding = jax.random.normal(k_cls, (D,), dtype=jnp.float32)
    position_embedding = jax.random.normal(k_pos, (num_positions, D), dtype=jnp.float32) * 0.02

    fn = jax.jit(clip_vision_embeddings, static_argnums=(4,))
    out = fn(image, patch_weight, class_embedding, position_embedding, P)
    out = jax.block_until_ready(out)

    ref = _reference(image, patch_weight, class_embedding, position_embedding, P)
    assert out.shape == (B, num_positions, D), out.shape
    # bf16 MXU inputs (f32 accumulation) -> compare to f32 reference with
    # bf16-level tolerance.
    assert jnp.allclose(out, ref, atol=2e-2, rtol=2e-2), "mismatch vs reference"
    print("KERNEL_OK")
</pallas_src>

<mosaic_0001>
module attributes {stable_mosaic.version = 11 : i64} {
  func.func @_embed_kernel(%arg0: i32, %arg1: i32, %arg2: memref<1x24x128xbf16, #tpu.memory_space<vmem>>, %arg3: memref<128x32xbf16, #tpu.memory_space<vmem>>, %arg4: memref<17x32xf32, #tpu.memory_space<vmem>>, %arg5: memref<1x17x32xf32, #tpu.memory_space<vmem>>) attributes {dimension_semantics = [#tpu.dimension_semantics<parallel>, #tpu.dimension_semantics<parallel>], iteration_bounds = array<i64: 1, 2>, scalar_prefetch = 0 : i64, scratch_operands = 0 : i64, tpu.core_type = #tpu.core_type<tc>, window_params = [{transform_indices = @transform_0, window_bounds = array<i64: 1, 24, 128>}, {transform_indices = @transform_1, window_bounds = array<i64: 128, 32>}, {transform_indices = @transform_2, window_bounds = array<i64: 17, 32>}, {transform_indices = @transform_3, window_bounds = array<i64: 1, 17, 32>}]} {
    %c0 = arith.constant 0 : index
    %c0_0 = arith.constant 0 : index
    %c0_1 = arith.constant 0 : index
    %0 = vector.load %arg2[%c0, %c0_0, %c0_1] : memref<1x24x128xbf16, #tpu.memory_space<vmem>>, vector<1x24x128xbf16>
    %1 = vector.shape_cast %0 : vector<1x24x128xbf16> to vector<24x128xbf16>
    %c0_2 = arith.constant 0 : index
    %c0_3 = arith.constant 0 : index
    %2 = vector.load %arg3[%c0_2, %c0_3] : memref<128x32xbf16, #tpu.memory_space<vmem>>, vector<128x32xbf16>
    %cst = arith.constant dense<0.000000e+00> : vector<24x32xf32>
    %3 = tpu.matmul %1, %2, %cst {dimension_numbers = #tpu.dot_dimension_numbers<[1], [0], [0], [1], [0, 0, 1, 1], [], []>} : vector<24x128xbf16>, vector<128x32xbf16>, vector<24x32xf32> -> vector<24x32xf32>
    %4 = vector.extract_strided_slice %3 {offsets = [0, 0], sizes = [17, 32], strides = [1, 1]} : vector<24x32xf32> to vector<17x32xf32>
    %c0_4 = arith.constant 0 : index
    %c0_5 = arith.constant 0 : index
    %5 = vector.load %arg4[%c0_4, %c0_5] : memref<17x32xf32, #tpu.memory_space<vmem>>, vector<17x32xf32>
    %6 = arith.addf %4, %5 : vector<17x32xf32>
    %c0_6 = arith.constant 0 : index
    %c0_7 = arith.constant 0 : index
    %c0_8 = arith.constant 0 : index
    %7 = vector.load %arg5[%c0_6, %c0_7, %c0_8] : memref<1x17x32xf32, #tpu.memory_space<vmem>>, vector<1x17x32xf32>
    %8 = vector.shape_cast %7 : vector<1x17x32xf32> to vector<17x32xf32>
    %9 = vector.shape_cast %6 : vector<17x32xf32> to vector<1x17x32xf32>
    tpu.vector_store %arg5[%c0_6, %c0_7, %c0_8], %9 {strides = array<i32>} : memref<1x17x32xf32, #tpu.memory_space<vmem>>, vector<1x17x32xf32>,
    return
  }
  func.func @transform_0(%arg0: i32, %arg1: i32) -> (i32, i32, i32) {
    %c0_i32 = arith.constant 0 : i32
    %c0_i32_0 = arith.constant 0 : i32
    %c0_i32_1 = arith.constant 0 : i32
    return %arg1, %c0_i32, %c0_i32_0 : i32, i32, i32
  }
  func.func @transform_1(%arg0: i32, %arg1: i32) -> (i32, i32) {
    %c0_i32 = arith.constant 0 : i32
    %c0_i32_0 = arith.constant 0 : i32
    return %c0_i32, %arg0 : i32, i32
  }
  func.func @transform_2(%arg0: i32, %arg1: i32) -> (i32, i32) {
    %c0_i32 = arith.constant 0 : i32
    %c0_i32_0 = arith.constant 0 : i32
    return %c0_i32, %arg0 : i32, i32
  }
  func.func @transform_3(%arg0: i32, %arg1: i32) -> (i32, i32, i32) {
    %c0_i32 = arith.constant 0 : i32
    %c0_i32_0 = arith.constant 0 : i32
    return %arg1, %c0_i32, %arg0 : i32, i32, i32
  }
}

</mosaic_0001>

<llo_original>
// kernel: clip_vision_embeddings.1
$region0: #{clip_vision_embeddings.1}
  #allocation0 [shape = 'u32[]', space=smem, size = 0x4, offset = 0x4, fixed_abs, tag = 'smem constant byte address 0x4 - core index']
  #allocation1 [shape = 'u32[144,128]{1,0:T(1,128)}', space=vmem, size = 0x12000, scoped, tag = 'internal scratch']
  %s0 = inlined_call_operand.vmem [shape: bf16[2,24,128], index: 0, kind: input, shape index: {}]
  %s1 = inlined_call_operand.vmem [shape: bf16[128,32], index: 1, kind: input, shape index: {}]
  %s2 = inlined_call_operand.vmem [shape: f32[17,32], index: 2, kind: input, shape index: {}]
  %s3 = inlined_call_operand.vmem [shape: f32[2,17,32], index: 3, kind: output, shape index: {}]
  %s4 = sld [smem:[#allocation0]]
  $region45: #{clip_vision_embeddings.1} parent=0
    _
  %s6 = ssub.s32 1, %s4
  %s7 = scalar_select 0, %s6, %s4
  loop: start=0, step=1, limit=4
  $region2: #{clip_vision_embeddings.1} parent=0 // loop_pre_header
    _
  $region3: #{clip_vision_embeddings.1} parent=0 // loop_header
    %s9 = sphi 0, %s13
    %p10 = scmp.ge.s32.totalorder %s9, 4
    %s16 = sphi 0, %s28
    %s17 = sphi 0, %s24
    %s18 = sphi 0, %s16
    %s19 = sphi 0, %s17
    %s20 = sphi 0, %s18
    %s21 = sphi 0, %s19
    %s31 = sphi 0, %s33
    %s34 = sphi 0, %s31
    %s35 = sphi 0, %s34
    %s51 = sphi 0, %s35
    %s57 = sphi 0, %s59
    %s60 = sphi 0, %s57
    %s61 = sphi 0, %s60
    %s77 = sphi 0, %s61
    %s83 = sphi 0, %s85
    %s86 = sphi 0, %s83
    %s87 = sphi 0, %s86
    %s103 = sphi 0, %s87
    %s111 = sphi 0, %s113
    %s114 = sphi 0, %s111
    %s115 = sphi 0, %s114
    %s131 = sphi 0, %s115
  $region4: #{clip_vision_embeddings.1} parent=0 // loop_header_branch
    %12 = sbr.rel (%p10) target = $region8
  $region5: #{clip_vision_embeddings.1} parent=0 // loop_body
    %s14 = ssub.s32 %s9, 1
    %s15 = ssub.s32 %s9, 2
    %s22 = sadd.s32 1, %s17
    %p23 = scmp.ge.s32.totalorder %s22, 2
    %s24 = scalar_select %p23, 0, %s22
    %s25 = sadd.s32 1, %s16
    %s26 = scalar_select %p23, %s25, %s16
    %p27 = scmp.ge.s32.totalorder %s26, 1
    %s28 = scalar_select %p27, 0, %s26
    %s29 = ssub.s32 %s17, %s24
    %p30 = scmp.eq.s32.totalorder %s29, 0
    %s32 = sadd.s32 %s31, 1
    %s33 = scalar_select %p30, %s31, %s32
    %p36 = pneg %p30
    %p37 = scmp.eq.s32.totalorder %s9, 1
    %p38 = por %p36, %p37
    %p39 = scmp.ne.s32.totalorder %s31, %s34
    %p40 = scmp.eq.s32.totalorder %s9, 0
    %p41 = por %p39, %p40
    %p42 = scmp.ne.s32.totalorder %s31, %s34
    %p43 = scmp.eq.s32.totalorder %s14, 1
    %p44 = por %p42, %p43
    %p45 = scmp.ne.s32.totalorder %s34, %s35
    %p46 = scmp.eq.s32.totalorder %s14, 0
    %p47 = por %p45, %p46
    %p48 = scmp.ne.s32.totalorder %s34, %s35
    %p49 = scmp.eq.s32.totalorder %s15, 1
    %p50 = por %p48, %p49
    %p52 = scmp.ne.s32.totalorder %s35, %s51
    %p53 = scmp.eq.s32.totalorder %s15, 0
    %p54 = por %p52, %p53
    %s55 = ssub.s32 %s16, %s28
    %p56 = scmp.eq.s32.totalorder %s55, 0
    %s58 = sadd.s32 %s57, 1
    %s59 = scalar_select %p56, %s57, %s58
    %p62 = pneg %p56
    %p63 = scmp.eq.s32.totalorder %s9, 1
    %p64 = por %p62, %p63
    %p65 = scmp.ne.s32.totalorder %s57, %s60
    %p66 = scmp.eq.s32.totalorder %s9, 0
    %p67 = por %p65, %p66
    %p68 = scmp.ne.s32.totalorder %s57, %s60
    %p69 = scmp.eq.s32.totalorder %s14, 1
    %p70 = por %p68, %p69
    %p71 = scmp.ne.s32.totalorder %s60, %s61
    %p72 = scmp.eq.s32.totalorder %s14, 0
    %p73 = por %p71, %p72
    %p74 = scmp.ne.s32.totalorder %s60, %s61
    %p75 = scmp.eq.s32.totalorder %s15, 1
    %p76 = por %p74, %p75
    %p78 = scmp.ne.s32.totalorder %s61, %s77
    %p79 = scmp.eq.s32.totalorder %s15, 0
    %p80 = por %p78, %p79
    %s81 = ssub.s32 %s16, %s28
    %p82 = scmp.eq.s32.totalorder %s81, 0
    %s84 = sadd.s32 %s83, 1
    %s85 = scalar_select %p82, %s83, %s84
    %p88 = pneg %p82
    %p89 = scmp.eq.s32.totalorder %s9, 1
    %p90 = por %p88, %p89
    %p91 = scmp.ne.s32.totalorder %s83, %s86
    %p92 = scmp.eq.s32.totalorder %s9, 0
    %p93 = por %p91, %p92
    %p94 = scmp.ne.s32.totalorder %s83, %s86
    %p95 = scmp.eq.s32.totalorder %s14, 1
    %p96 = por %p94, %p95
    %p97 = scmp.ne.s32.totalorder %s86, %s87
    %p98 = scmp.eq.s32.totalorder %s14, 0
    %p99 = por %p97, %p98
    %p100 = scmp.ne.s32.totalorder %s86, %s87
    %p101 = scmp.eq.s32.totalorder %s15, 1
    %p102 = por %p100, %p101
    %p104 = scmp.ne.s32.totalorder %s87, %s103
    %p105 = scmp.eq.s32.totalorder %s15, 0
    %p106 = por %p104, %p105
    %s107 = ssub.s32 %s17, %s24
    %s108 = ssub.s32 %s16, %s28
    %s109 = sor.u32 %s107, %s108
    %p110 = scmp.eq.s32.totalorder %s109, 0
    %s112 = sadd.s32 %s111, 1
    %s113 = scalar_select %p110, %s111, %s112
    %p116 = pneg %p110
    %p117 = scmp.eq.s32.totalorder %s9, 1
    %p118 = por %p116, %p117
    %p119 = scmp.ne.s32.totalorder %s111, %s114
    %p120 = scmp.eq.s32.totalorder %s9, 0
    %p121 = por %p119, %p120
    %p122 = scmp.ne.s32.totalorder %s111, %s114
    %p123 = scmp.eq.s32.totalorder %s14, 1
    %p124 = por %p122, %p123
    %p125 = scmp.ne.s32.totalorder %s114, %s115
    %p126 = scmp.eq.s32.totalorder %s14, 0
    %p127 = por %p125, %p126
    %p128 = scmp.ne.s32.totalorder %s114, %s115
    %p129 = scmp.eq.s32.totalorder %s15, 1
    %p130 = por %p128, %p129
    %p132 = scmp.ne.s32.totalorder %s115, %s131
    %p133 = scmp.eq.s32.totalorder %s15, 0
    %p134 = por %p132, %p133
    %p135 = scmp.le.s32.totalorder 1, %s9
    %p136 = scmp.lt.s32.totalorder %s9, 3
    %p137 = pnand %p135, %p136
    %p138 = pneg %p137
    // Predicated region
    $region9: #{clip_vision_embeddings.1} parent=5 // pred_check
      _
    $region10: #{clip_vision_embeddings.1} parent=5 // pred_check_branch
      %140 = sbr.rel (%p137) target = $region12
    $region11: #{clip_vision_embeddings.1} parent=5 // pred_region
      %s141 = ssub.s32 %s9, 1
      // Predicated region
      $region13: #{clip_vision_embeddings.1} parent=11 // pred_check
        %p142 = pneg %p73
      $region14: #{clip_vision_embeddings.1} parent=11 // pred_check_branch
        %144 = sbr.rel (%p142) target = $region16
      $region15: #{clip_vision_embeddings.1} parent=11 // pred_region
        %p145 = scmp.lt.s32.totalorder %s18, 0
        %s146 = scalar_select %p145, %s18, 0
        %s147 = smul.addr %s146, 4
        %s148 = scalar_lea.vmem %s1, %s147
      $region16: #{clip_vision_embeddings.1} parent=11 // pred_fallthru
        _
      // Predicated region
      $region17: #{clip_vision_embeddings.1} parent=11 // pred_check
        %p149 = pneg %p99
      $region18: #{clip_vision_embeddings.1} parent=11 // pred_check_branch
        %151 = sbr.rel (%p149) target = $region20
      $region19: #{clip_vision_embeddings.1} parent=11 // pred_region
        %p152 = scmp.lt.s32.totalorder %s18, 0
        %s153 = scalar_select %p152, %s18, 0
        %s154 = smul.addr %s153, 8
        %s155 = scalar_lea.vmem %s2, %s154
      $region20: #{clip_vision_embeddings.1} parent=11 // pred_fallthru
        _
    $region12: #{clip_vision_embeddings.1} parent=5 // pred_fallthru
      _
    %p156 = scmp.lt.s32.totalorder %s9, 2
    // Predicated region
    $region21: #{clip_vision_embeddings.1} parent=5 // pred_check
      %p157 = pneg %p156
    $region22: #{clip_vision_embeddings.1} parent=5 // pred_check_branch
      %159 = sbr.rel (%p157) target = $region24
    $region23: #{clip_vision_embeddings.1} parent=5 // pred_region
      // Predicated region
      $region25: #{clip_vision_embeddings.1} parent=23 // pred_check
        %p160 = pneg %p41
      $region26: #{clip_vision_embeddings.1} parent=23 // pred_check_branch
        %162 = sbr.rel (%p160) target = $region28
      $region27: #{clip_vision_embeddings.1} parent=23 // pred_region
        %p163 = scmp.lt.s32.totalorder %s17, 1
        %s164 = scalar_select %p163, %s17, 1
        %s165 = smul.addr %s164, 3
        %s166 = smul.addr %s165, 4
        %s167 = scalar_lea.vmem %s0, %s166
      $region28: #{clip_vision_embeddings.1} parent=23 // pred_fallthru
        _
    $region24: #{clip_vision_embeddings.1} parent=5 // pred_fallthru
      _
    %p168 = scmp.le.s32.totalorder 1, %s9
    %p169 = scmp.lt.s32.totalorder %s9, 3
    %p170 = pnand %p168, %p169
    %p171 = pneg %p170
    // Predicated region
    $region29: #{clip_vision_embeddings.1} parent=5 // pred_check
      _
    $region30: #{clip_vision_embeddings.1} parent=5 // pred_check_branch
      %173 = sbr.rel (%p170) target = $region32
    $region31: #{clip_vision_embeddings.1} parent=5 // pred_region
      %s174 = ssub.s32 %s9, 1
      %p175 = scmp.lt.s32.totalorder %s19, 1
      %s176 = scalar_select %p175, %s19, 1
      %s177 = smul.addr %s176, 3
      %s178 = smul.addr %s177, 4
      %s179 = scalar_lea.vmem %s0, %s178
      %p180 = pneg %p47
      %p181 = pneg %p44
      %p182 = scmp.lt.s32.totalorder %s18, 0
      %s183 = scalar_select %p182, %s18, 0
      %s184 = smul.addr %s183, 4
      %s185 = scalar_lea.vmem %s1, %s184
      %p186 = pneg %p73
      %p187 = pneg %p70
      %p188 = scmp.lt.s32.totalorder %s18, 0
      %s189 = scalar_select %p188, %s18, 0
      %s190 = smul.addr %s189, 8
      %s191 = scalar_lea.vmem %s2, %s190
      %p192 = pneg %p99
      %p193 = pneg %p96
      %p194 = pneg %p127
      %p195 = pneg %p124
      %p196 = scmp.lt.s32.totalorder %s19, 1
      %s197 = scalar_select %p196, %s19, 1
      %p198 = scmp.lt.s32.totalorder %s18, 0
      %s199 = scalar_select %p198, %s18, 0
      %s200 = smul.addr %s197, 3
      %s201 = sadd.s32 %s199, %s200
      %s202 = smul.addr %s201, 8
      %s203 = scalar_lea.vmem %s3, %s202
      %p204 = scmp.lt.s32.totalorder %s19, 1
      %s205 = scalar_select %p204, %s19, 1
      %s206 = smul.addr %s205, 3
      %s207 = smul.addr %s206, 4
      %s208 = scalar_lea.vmem %s0, %s207
      %p209 = scmp.lt.s32.totalorder %s18, 0
      %s210 = scalar_select %p209, %s18, 0
      %s211 = smul.addr %s210, 4
      %s212 = scalar_lea.vmem %s1, %s211
      %p213 = scmp.lt.s32.totalorder %s18, 0
      %s214 = scalar_select %p213, %s18, 0
      %s215 = smul.addr %s214, 8
      %s216 = scalar_lea.vmem %s2, %s215
      %p217 = scmp.lt.s32.totalorder %s19, 1
      %s218 = scalar_select %p217, %s19, 1
      %p219 = scmp.lt.s32.totalorder %s18, 0
      %s220 = scalar_select %p219, %s18, 0
      %s221 = smul.addr %s218, 3
      %s222 = sadd.s32 %s220, %s221
      %s223 = smul.addr %s222, 8
      %s224 = scalar_lea.vmem %s3, %s223
      %v226 = vld [vmem:[%s208] sm:$0xf]
      %v227 = vld [vmem:[%s208 + $0x4] sm:$0xf]
      %v228 = vld [vmem:[%s208 + $0x8] sm:$0xf]
      %v229 = vld [vmem:[%s212] sm:$0xf]
      %v230 = vld [vmem:[%s212 + $0x4] sm:$0xf]
      %v231 = vld [vmem:[%s212 + $0x8] sm:$0xf]
      %v232 = vld [vmem:[%s212 + $0xc] sm:$0xf]
      %v233 = vld [vmem:[%s212 + $0x10] sm:$0xf]
      %v234 = vld [vmem:[%s212 + $0x14] sm:$0xf]
      %v235 = vld [vmem:[%s212 + $0x18] sm:$0xf]
      %v236 = vld [vmem:[%s212 + $0x1c] sm:$0xf]
      %v237 = vld [vmem:[%s212 + $0x20] sm:$0xf]
      %v238 = vld [vmem:[%s212 + $0x24] sm:$0xf]
      %v239 = vld [vmem:[%s212 + $0x28] sm:$0xf]
      %v240 = vld [vmem:[%s212 + $0x2c] sm:$0xf]
      %v241 = vld [vmem:[%s212 + $0x30] sm:$0xf]
      %v242 = vld [vmem:[%s212 + $0x34] sm:$0xf]
      %v243 = vld [vmem:[%s212 + $0x38] sm:$0xf]
      %v244 = vld [vmem:[%s212 + $0x3c] sm:$0xf]
      %v248 = vunpack.c.l.b16 %v226
      %v249 = vunpack.c.l.b16 %v227
      %v250 = vunpack.c.l.b16 %v228
      %v251 = vpack.c.b16 %v249, %v248
      %v252 = vpack.c.b16 %v250, %v250
      %v271 = vunpack.c.l.b16 %v229
      %v272 = vunpack.c.l.b16 %v230
      %v273 = vunpack.c.l.b16 %v231
      %v274 = vunpack.c.l.b16 %v232
      %v275 = vunpack.c.l.b16 %v233
      %v276 = vunpack.c.l.b16 %v234
      %v277 = vunpack.c.l.b16 %v235
      %v278 = vunpack.c.l.b16 %v236
      %v279 = vunpack.c.l.b16 %v237
      %v280 = vunpack.c.l.b16 %v238
      %v281 = vunpack.c.l.b16 %v239
      %v282 = vunpack.c.l.b16 %v240
      %v283 = vunpack.c.l.b16 %v241
      %v284 = vunpack.c.l.b16 %v242
      %v285 = vunpack.c.l.b16 %v243
      %v286 = vunpack.c.l.b16 %v244
      %v287 = vpack.c.b16 %v272, %v271
      %v288 = vpack.c.b16 %v274, %v273
      %v289 = vpack.c.b16 %v276, %v275
      %v290 = vpack.c.b16 %v278, %v277
      %v291 = vpack.c.b16 %v280, %v279
      %v292 = vpack.c.b16 %v282, %v281
      %v293 = vpack.c.b16 %v284, %v283
      %v294 = vpack.c.b16 %v286, %v285
      %303 = vmatprep.subr.bf16.mxu0 0
      %304 = vmatpush1.bf16.msra.mxu0 %v287
      %305 = vmatprep.subr.bf16.mxu0 0
      %306 = vmatpush1.bf16.msra.mxu0 %v288
      %307 = vmatprep.subr.bf16.mxu0 0
      %308 = vmatpush1.bf16.msra.mxu0 %v289
      %309 = vmatprep.subr.bf16.mxu0 0
      %310 = vmatpush1.bf16.msra.mxu0 %v290
      %311 = vmatprep.subr.bf16.mxu0 0
      %312 = vmatpush1.bf16.msra.mxu0 %v291
      %313 = vmatprep.subr.bf16.mxu0 0
      %314 = vmatpush1.bf16.msra.mxu0 %v292
      %315 = vmatprep.subr.bf16.mxu0 0
      %316 = vmatpush1.bf16.msra.mxu0 %v293
      %317 = vmatprep.subr.bf16.mxu0 0
      %318 = vmatpush1.bf16.msra.mxu0 %v294
      %319 = vmatprep.subr.bf16.mxu0 0
      %320 = vmatpush1.bf16.msra.mxu0 0
      %321 = vmatprep.subr.bf16.mxu0 0
      %322 = vmatpush1.bf16.msra.mxu0 0
      %323 = vmatprep.subr.bf16.mxu0 0
      %324 = vmatpush1.bf16.msra.mxu0 0
      %325 = vmatprep.subr.bf16.mxu0 0
      %326 = vmatpush1.bf16.msra.mxu0 0
      %327 = vmatprep.subr.bf16.mxu0 0
      %328 = vmatpush1.bf16.msra.mxu0 0
      %329 = vmatprep.subr.bf16.mxu0 0
      %330 = vmatpush1.bf16.msra.mxu0 0
      %331 = vmatprep.subr.bf16.mxu0 0
      %332 = vmatpush1.bf16.msra.mxu0 0
      %333 = vmatprep.subr.bf16.mxu0 0
      %334 = vmatpush1.bf16.msra.mxu0 0
      %335 = vmatprep.mubr.bf16.mxu0 0
      %336 = vmatmul.mubr.bf16.gmra.mrb[0].mxu0 %v251
      %v337 = vpop.f32.mrb[0].mxu0
      %v338 = vadd.f32 0.0, %v337
      %v339 = vpop.f32.mrb[0].mxu0
      %v340 = vpop.f32.mrb[0].mxu0
      %v341 = vadd.f32 0.0, %v340
      %v342 = vpop.f32.mrb[0].mxu0
      %343 = vmatprep.mubr.bf16.mxu0 0
      %344 = vmatmul.mubr.bf16.gmra.mrb[0].mxu0 %v252
      %v345 = vpop.f32.mrb[0].mxu0
      %v346 = vadd.f32 0.0, %v345
      %v347 = vpop.f32.mrb[0].mxu0
      %v348 = vpop.f32.mrb[0].mxu0
      %v349 = vpop.f32.mrb[0].mxu0
      %350 = vdwg.mxu0
      %v351 = vld [vmem:[%s216] sm:$0xff]
      %v352 = vld [vmem:[%s216 + $0x8] sm:$0xff]
      %v353 = vld [vmem:[%s216 + $0x10] sm:$0x1]
      %v354 = vadd.f32 %v338, %v351
      %v355 = vadd.f32 %v341, %v352
      %v356 = vadd.f32 %v346, %v353
      %vm357 = vcmask 261120
      %358 = vst.msk [vmem:[%s224] sm:$0xff] %vm357, %v354
      %359 = vst.msk [vmem:[%s224 + $0x8] sm:$0xff] %vm357, %v355
      %vm360 = vcmask 253952
      %361 = vst.msk [vmem:[%s224 + $0x10] sm:$0x1] %vm360, %v356
      %p362 = scmp.lt.s32.totalorder %s19, 1
      %s363 = scalar_select %p362, %s19, 1
      %p364 = scmp.lt.s32.totalorder %s18, 0
      %s365 = scalar_select %p364, %s18, 0
      %s366 = smul.addr %s363, 3
      %s367 = sadd.s32 %s365, %s366
      %s368 = smul.addr %s367, 8
      %s369 = scalar_lea.vmem %s3, %s368
      // Predicated region
      $region33: #{clip_vision_embeddings.1} parent=31 // pred_check
        %p370 = pneg %p124
      $region34: #{clip_vision_embeddings.1} parent=31 // pred_check_branch
        %372 = sbr.rel (%p370) target = $region36
      $region35: #{clip_vision_embeddings.1} parent=31 // pred_region
        _
      $region36: #{clip_vision_embeddings.1} parent=31 // pred_fallthru
        _
    $region32: #{clip_vision_embeddings.1} parent=5 // pred_fallthru
      _
    %p373 = scmp.le.s32.totalorder 2, %s9
    // Predicated region
    $region37: #{clip_vision_embeddings.1} parent=5 // pred_check
      %p374 = pneg %p373
    $region38: #{clip_vision_embeddings.1} parent=5 // pred_check_branch
      %376 = sbr.rel (%p374) target = $region40
    $region39: #{clip_vision_embeddings.1} parent=5 // pred_region
      %s377 = ssub.s32 %s9, 2
      // Predicated region
      $region41: #{clip_vision_embeddings.1} parent=39 // pred_check
        %p378 = pneg %p130
      $region42: #{clip_vision_embeddings.1} parent=39 // pred_check_branch
        %380 = sbr.rel (%p378) target = $region44
      $region43: #{clip_vision_embeddings.1} parent=39 // pred_region
        %p381 = scmp.lt.s32.totalorder %s21, 1
        %s382 = scalar_select %p381, %s21, 1
        %p383 = scmp.lt.s32.totalorder %s20, 0
        %s384 = scalar_select %p383, %s20, 0
        %s385 = smul.addr %s382, 3
        %s386 = sadd.s32 %s384, %s385
        %s387 = smul.addr %s386, 8
        %s388 = scalar_lea.vmem %s3, %s387
      $region44: #{clip_vision_embeddings.1} parent=39 // pred_fallthru
        _
    $region40: #{clip_vision_embeddings.1} parent=5 // pred_fallthru
      _
  $region6: #{clip_vision_embeddings.1} parent=0 // loop_footer
    %s13 = sadd.s32 1, %s9
  $region7: #{clip_vision_embeddings.1} parent=0 // loop_footer_branch
    %8 = sbr.rel target = $region3
  $region8: #{clip_vision_embeddings.1} parent=0 // loop_exit
    _

</llo_original>
